<compile_context>
chip_gen: v5e
topology: v5e:2x2
jax: 0.10.0
libtpu: 0.0.40
codegen_flags: <defaults>
</compile_context>

<pallas_src>
import functools

import jax
import jax.numpy as jnp
from jax.experimental import pallas as pl
from jax.experimental.pallas import tpu as pltpu

EPS = 1e-5  # PyTorch nn.LayerNorm default eps


# ----------------------------------------------------------------------------
# Hardware-aware knobs
# ----------------------------------------------------------------------------
def _vmem_capacity_bytes():
    try:
        info = pltpu.get_tpu_info()
        cap = getattr(info, "vmem_capacity_bytes", None)
        if cap:
            return int(cap)
    except Exception:
        pass
    return 128 * 1024 * 1024


def _vmem_budget():
    cap = _vmem_capacity_bytes()
    if cap <= 64 * 1024 * 1024:           # v7x: 64 MiB / TC -> leave headroom
        return 52 * 1024 * 1024
    return 100 * 1024 * 1024              # v5e / v6e: 128 MiB physical


def _softmax_exp_dtype():
    # bf16 EUP exists on v6e / v7x; keep f32 exponentials on v5e and older.
    try:
        kind = jax.devices()[0].device_kind.lower()
    except Exception:
        return jnp.float32
    if any(old in kind for old in ("v2", "v3", "v4", "v5")):
        return jnp.float32
    return jnp.bfloat16


_BUFFERED1_OK = None


def _supports_buffered1():
    """Probe once whether pipeline_mode=pl.Buffered(1) compiles+runs here."""
    global _BUFFERED1_OK
    if _BUFFERED1_OK is None:
        try:
            def k(a_ref, c_ref, o_ref):
                o_ref[...] = a_ref[...] + c_ref[...]

            f = pl.pallas_call(
                k,
                out_shape=jax.ShapeDtypeStruct((16, 128), jnp.float32),
                grid=(2,),
                in_specs=[pl.BlockSpec((8, 128), lambda i: (i, 0)),
                          pl.BlockSpec((8, 128), lambda i: (0, 0),
                                       pipeline_mode=pl.Buffered(1))],
                out_specs=pl.BlockSpec((8, 128), lambda i: (i, 0)))
            jax.block_until_ready(
                f(jnp.zeros((16, 128), jnp.float32), jnp.ones((8, 128), jnp.float32)))
            _BUFFERED1_OK = True
        except Exception:
            _BUFFERED1_OK = False
    return _BUFFERED1_OK


def _const_spec(shape):
    """Grid-invariant block: single-buffer it (saves VMEM) when supported."""
    idx = lambda *_: (0,) * len(shape)
    if _supports_buffered1():
        return pl.BlockSpec(shape, idx, pipeline_mode=pl.Buffered(1))
    return pl.BlockSpec(shape, idx)


def _choose_tile(n, target, align):
    """Largest tile <= target dividing n with tile % align == 0, else full extent."""
    if n <= target:
        return n
    for t in range(target, align - 1, -1):
        if n % t == 0 and t % align == 0:
            return t
    return n


def _choose_group(n, target=8):
    for t in range(min(n, target), 0, -1):
        if n % t == 0:
            return t
    return 1


# ----------------------------------------------------------------------------
# Stage A: LayerNorm1 + fused QKV projection (row-tiled over all tokens)
# ----------------------------------------------------------------------------
def _ln_qkv_kernel(x_ref, ln_w_ref, ln_b_ref, w_ref, b_ref, qkv_ref, *, scale, C):
    x = x_ref[...].astype(jnp.float32)                          # (TM, C)
    mu = jnp.mean(x, axis=-1, keepdims=True)
    var = jnp.mean(jnp.square(x - mu), axis=-1, keepdims=True)
    xn = (x - mu) * jax.lax.rsqrt(var + EPS)
    xn = (xn * ln_w_ref[...] + ln_b_ref[...]).astype(jnp.bfloat16)

    qkv = jnp.dot(xn, w_ref[...], preferred_element_type=jnp.float32) + b_ref[...]
    qkv_ref[0] = (qkv[:, :C] * scale).astype(qkv_ref.dtype)     # pre-scaled Q
    qkv_ref[1] = qkv[:, C:2 * C].astype(qkv_ref.dtype)
    qkv_ref[2] = qkv[:, 2 * C:].astype(qkv_ref.dtype)


# ----------------------------------------------------------------------------
# Stage B: attention.  G (window*head) slices per grid step.
# ----------------------------------------------------------------------------
def _attn_single_kernel(q_ref, k_ref, v_ref, o_ref, *, exp_dtype):
    # Whole KV fits one block: single-pass softmax, no online bookkeeping.
    q = q_ref[...]                                              # (G, TQ, hd) bf16
    k = k_ref[...]                                              # (G, Np, hd) bf16
    v = v_ref[...]
    s = jnp.einsum('gqd,gkd->gqk', q, k, preferred_element_type=jnp.float32)
    m = jnp.max(s, axis=-1, keepdims=True)
    p = jnp.exp((s - m).astype(exp_dtype))
    l = jnp.sum(p.astype(jnp.float32), axis=-1, keepdims=True)
    o = jnp.einsum('gqk,gkd->gqd', p.astype(v.dtype), v,
                   preferred_element_type=jnp.float32)
    o_ref[...] = (o * pl.reciprocal(l, approx=True)).astype(o_ref.dtype)


def _flash_attn_kernel(q_ref, k_ref, v_ref, o_ref, m_scr, l_scr, acc_scr, *, exp_dtype):
    kv = pl.program_id(2)

    @pl.when(kv == 0)
    def _init():
        m_scr[...] = jnp.full(m_scr.shape, -jnp.inf, jnp.float32)
        l_scr[...] = jnp.zeros(l_scr.shape, jnp.float32)
        acc_scr[...] = jnp.zeros(acc_scr.shape, jnp.float32)

    q = q_ref[...]                                              # (G, TQ, hd) bf16
    k = k_ref[...]                                              # (G, TK, hd) bf16
    v = v_ref[...]

    s = jnp.einsum('gqd,gkd->gqk', q, k, preferred_element_type=jnp.float32)

    m_prev = m_scr[...]
    m_new = jnp.maximum(m_prev, jnp.max(s, axis=-1, keepdims=True))
    alpha = jnp.exp(m_prev - m_new)                             # f32
    p = jnp.exp((s - m_new).astype(exp_dtype))
    l_scr[...] = alpha * l_scr[...] + jnp.sum(p.astype(jnp.float32), -1, keepdims=True)
    acc_scr[...] = alpha * acc_scr[...] + jnp.einsum(
        'gqk,gkd->gqd', p.astype(v.dtype), v, preferred_element_type=jnp.float32)
    m_scr[...] = m_new

    @pl.when(kv == pl.num_programs(2) - 1)
    def _finalize():
        inv_l = pl.reciprocal(l_scr[...], approx=True)          # EUP slot
        o_ref[...] = (acc_scr[...] * inv_l).astype(o_ref.dtype)


# ----------------------------------------------------------------------------
# Stage C: proj + residual-1 + LN2 + MLP (mlp_dim streamed) + residual-2
# ----------------------------------------------------------------------------
def _proj_mlp_kernel(o_ref, short_ref, wp_ref, bp_ref, ln_w_ref, ln_b_ref,
                     w1_ref, b1_ref, w2_ref, b2_ref, out_ref,
                     xn_scr, x1_scr, acc_scr):
    j = pl.program_id(1)

    @pl.when(j == 0)
    def _head():
        o = jnp.dot(o_ref[...], wp_ref[...], preferred_element_type=jnp.float32) + bp_ref[...]
        x1 = short_ref[...].astype(jnp.float32) + o             # residual 1
        x1_scr[...] = x1
        mu = jnp.mean(x1, axis=-1, keepdims=True)
        var = jnp.mean(jnp.square(x1 - mu), axis=-1, keepdims=True)
        xn = (x1 - mu) * jax.lax.rsqrt(var + EPS)
        xn_scr[...] = (xn * ln_w_ref[...] + ln_b_ref[...]).astype(jnp.bfloat16)
        acc_scr[...] = jnp.zeros(acc_scr.shape, jnp.float32)

    h = jnp.dot(xn_scr[...], w1_ref[...], preferred_element_type=jnp.float32) + b1_ref[...]
    h = jax.nn.gelu(h, approximate=False)                       # exact GELU (torch default)
    acc_scr[...] += jnp.dot(h.astype(jnp.bfloat16), w2_ref[...],
                            preferred_element_type=jnp.float32)

    @pl.when(j == pl.num_programs(1) - 1)
    def _tail():
        out_ref[...] = (x1_scr[...] + acc_scr[...] + b2_ref[...]).astype(out_ref.dtype)


# ----------------------------------------------------------------------------
# Wrapper
# ----------------------------------------------------------------------------
def block_forward(x, params, *, num_heads, window_size=0,
                  q_tile=256, kv_tile=256, row_tile=None, mlp_tile=512):
    B, H, W, C = x.shape
    assert C % num_heads == 0
    hd = C // num_heads
    scale = hd ** -0.5
    f32, bf16 = jnp.float32, jnp.bfloat16
    R = B * H * W

    vmem_budget = _vmem_budget()
    if row_tile is None:
        row_tile = 512 if _vmem_capacity_bytes() > 64 * 1024 * 1024 else 256
    exp_dtype = _softmax_exp_dtype()

    # --- parameters: matmul weights to bf16 (f32 accumulate), vectors to f32 ----
    wqkv = params['wqkv'].astype(bf16)                  # (C, 3C), pre-transposed
    bqkv = params['bqkv'].reshape(1, 3 * C).astype(f32)
    ln1_w = params['ln1_w'].reshape(1, C).astype(f32)
    ln1_b = params['ln1_b'].reshape(1, C).astype(f32)
    wproj = params['wproj'].astype(bf16)
    bproj = params['bproj'].reshape(1, C).astype(f32)
    ln2_w = params['ln2_w'].reshape(1, C).astype(f32)
    ln2_b = params['ln2_b'].reshape(1, C).astype(f32)
    mlp_dim = params['w1'].shape[1]
    w1 = params['w1'].astype(bf16)
    b1 = params['b1'].reshape(1, mlp_dim).astype(f32)
    w2 = params['w2'].astype(bf16)
    b2 = params['b2'].reshape(1, C).astype(f32)

    # ---------------- Stage A: LN1 + fused QKV (row tiled) ---------------------
    x2d = x.reshape(R, C)
    TM = _choose_tile(R, row_tile, 8)

    qkv_stacked = pl.pallas_call(
        functools.partial(_ln_qkv_kernel, scale=scale, C=C),
        out_shape=jax.ShapeDtypeStruct((3, R, C), bf16),
        grid=(R // TM,),
        in_specs=[pl.BlockSpec((TM, C), lambda i: (i, 0)),
                  _const_spec((1, C)), _const_spec((1, C)),
                  _const_spec((C, 3 * C)), _const_spec((1, 3 * C))],
        out_specs=pl.BlockSpec((3, TM, C), lambda i: (0, i, 0)),
        compiler_params=pltpu.CompilerParams(
            dimension_semantics=("parallel",), vmem_limit_bytes=vmem_budget),
    )(x2d, ln1_w, ln1_b, wqkv, bqkv)

    # ------- glue: window partition (+SAM zero padding) + head split (one pass) -
    if window_size > 0:
        ws = window_size
        ph, pw = (-H) % ws, (-W) % ws
        Hp, Wp = H + ph, W + pw
        NW = B * (Hp // ws) * (Wp // ws)
        Np = ws * ws

        t = qkv_stacked.reshape(3, B, H, W, C)
        if ph or pw:
            # Torch pads the *normalized* tokens with zeros, so padded tokens' q/k/v
            # are exactly the projection biases (Q already carries the 1/sqrt(hd) scale).
            fills = jnp.stack([bqkv[0, :C] * scale, bqkv[0, C:2 * C], bqkv[0, 2 * C:]], 0)
            pad_mask = (jnp.arange(Hp)[:, None] >= H) | (jnp.arange(Wp)[None, :] >= W)
            t = jnp.pad(t, ((0, 0), (0, 0), (0, ph), (0, pw), (0, 0)))
            t = jnp.where(pad_mask[None, None, :, :, None],
                          fills[:, None, None, None, :].astype(t.dtype), t)
        t = t.reshape(3, B, Hp // ws, ws, Wp // ws, ws, C)
        t = t.transpose(0, 1, 2, 4, 3, 5, 6).reshape(3, NW, Np, C)
    else:
        ws = 0
        Hp, Wp = H, W
        NW, Np = B, H * W
        t = qkv_stacked.reshape(3, NW, Np, C)

    qkvh = t.reshape(3, NW, Np, num_heads, hd).transpose(0, 1, 3, 2, 4)
    qkvh = qkvh.reshape(3, NW * num_heads, Np, hd)              # bf16, stacked q/k/v
    BH = NW * num_heads

    # ---------------- Stage B: attention -----------------------------------------
    TQ = _choose_tile(Np, q_tile, 8)
    TK = _choose_tile(Np, kv_tile, 8)
    nq, nk = Np // TQ, Np // TK
    G = _choose_group(BH, 8)                                    # heads/windows per step

    out_shape_b = jax.ShapeDtypeStruct((BH, Np, hd), bf16)

    if nk == 1:
        o_heads = pl.pallas_call(
            functools.partial(_attn_single_kernel, exp_dtype=exp_dtype),
            out_shape=out_shape_b,
            grid=(BH // G, nq),
            in_specs=[pl.BlockSpec((None, G, TQ, hd), lambda b, i: (0, b, i, 0)),
                      pl.BlockSpec((None, G, TK, hd), lambda b, i: (1, b, 0, 0)),
                      pl.BlockSpec((None, G, TK, hd), lambda b, i: (2, b, 0, 0))],
            out_specs=pl.BlockSpec((G, TQ, hd), lambda b, i: (b, i, 0)),
            compiler_params=pltpu.CompilerParams(
                dimension_semantics=("parallel", "parallel"),
                vmem_limit_bytes=vmem_budget),
        )(qkvh, qkvh, qkvh)
    else:
        o_heads = pl.pallas_call(
            functools.partial(_flash_attn_kernel, exp_dtype=exp_dtype),
            out_shape=out_shape_b,
            grid=(BH // G, nq, nk),
            in_specs=[pl.BlockSpec((None, G, TQ, hd), lambda b, i, j: (0, b, i, 0)),
                      pl.BlockSpec((None, G, TK, hd), lambda b, i, j: (1, b, j, 0)),
                      pl.BlockSpec((None, G, TK, hd), lambda b, i, j: (2, b, j, 0))],
            out_specs=pl.BlockSpec((G, TQ, hd), lambda b, i, j: (b, i, 0)),
            scratch_shapes=[pltpu.VMEM((G, TQ, 1), jnp.float32),    # m
                            pltpu.VMEM((G, TQ, 1), jnp.float32),    # l
                            pltpu.VMEM((G, TQ, hd), jnp.float32)],  # acc
            compiler_params=pltpu.CompilerParams(
                dimension_semantics=("parallel", "parallel", "arbitrary"),
                vmem_limit_bytes=vmem_budget),
        )(qkvh, qkvh, qkvh)

    # ------------- glue: merge heads + window unpartition / crop (bf16) ---------
    if window_size > 0:
        o = o_heads.reshape(NW, num_heads, Np, hd).transpose(0, 2, 1, 3).reshape(NW, Np, C)
        o = o.reshape(B, Hp // ws, Wp // ws, ws, ws, C).transpose(0, 1, 3, 2, 4, 5)
        o = o.reshape(B, Hp, Wp, C)[:, :H, :W, :].reshape(R, C)
    else:
        o = o_heads.reshape(B, num_heads, Np, hd).transpose(0, 2, 1, 3).reshape(R, C)

    # -------- Stage C: proj + res-1 + LN2 + MLP (mlp_dim streamed) + res-2 ------
    TN = _choose_tile(mlp_dim, mlp_tile, 128)
    nj = mlp_dim // TN

    out = pl.pallas_call(
        _proj_mlp_kernel,
        out_shape=jax.ShapeDtypeStruct((R, C), x.dtype),
        grid=(R // TM, nj),
        in_specs=[pl.BlockSpec((TM, C), lambda i, j: (i, 0)),        # attn output
                  pl.BlockSpec((TM, C), lambda i, j: (i, 0)),        # shortcut
                  _const_spec((C, C)), _const_spec((1, C)),          # wproj, bproj
                  _const_spec((1, C)), _const_spec((1, C)),          # ln2_w, ln2_b
                  pl.BlockSpec((C, TN), lambda i, j: (0, j)),        # w1 tile
                  pl.BlockSpec((1, TN), lambda i, j: (0, j)),        # b1 tile
                  pl.BlockSpec((TN, C), lambda i, j: (j, 0)),        # w2 tile
                  _const_spec((1, C))],                              # b2
        out_specs=pl.BlockSpec((TM, C), lambda i, j: (i, 0)),
        scratch_shapes=[pltpu.VMEM((TM, C), jnp.bfloat16),           # xn (LN2 output)
                        pltpu.VMEM((TM, C), jnp.float32),            # x1 (residual 1)
                        pltpu.VMEM((TM, C), jnp.float32)],           # MLP accumulator
        compiler_params=pltpu.CompilerParams(
            dimension_semantics=("parallel", "arbitrary"),
            vmem_limit_bytes=vmem_budget),
    )(o, x2d, wproj, bproj, ln2_w, ln2_b, w1, b1, w2, b2)

    return out.reshape(B, H, W, C)


# ----------------------------------------------------------------------------
# Pure-JAX reference (mirrors the PyTorch forward exactly, incl. window padding)
# ----------------------------------------------------------------------------
def ref_block(x, p, num_heads, window_size=0):
    B, H, W, C = x.shape
    hd = C // num_heads
    scale = hd ** -0.5

    def ln(z, w, b):
        mu = z.mean(-1, keepdims=True)
        var = ((z - mu) ** 2).mean(-1, keepdims=True)
        return (z - mu) / jnp.sqrt(var + EPS) * w + b

    def attention(t):                                   # t: (nb, N, C)
        nb, N, _ = t.shape
        qkv = t @ p['wqkv'] + p['bqkv'].reshape(-1)
        qkv = qkv.reshape(nb, N, 3, num_heads, hd).transpose(2, 0, 3, 1, 4)
        qkv = qkv.reshape(3, nb * num_heads, N, hd)
        q, k, v = qkv[0], qkv[1], qkv[2]
        a = (q * scale) @ jnp.swapaxes(k, -2, -1)
        a = jax.nn.softmax(a, axis=-1)
        o = (a @ v).reshape(nb, num_heads, N, hd).transpose(0, 2, 1, 3).reshape(nb, N, C)
        return o @ p['wproj'] + p['bproj'].reshape(-1)

    shortcut = x
    xn = ln(x, p['ln1_w'].reshape(-1), p['ln1_b'].reshape(-1))
    if window_size > 0:
        ws = window_size
        ph, pw = (-H) % ws, (-W) % ws
        Hp, Wp = H + ph, W + pw
        xp = jnp.pad(xn, ((0, 0), (0, ph), (0, pw), (0, 0)))
        xw = xp.reshape(B, Hp // ws, ws, Wp // ws, ws, C)
        xw = xw.transpose(0, 1, 3, 2, 4, 5).reshape(-1, ws * ws, C)
        aw = attention(xw)
        a = aw.reshape(B, Hp // ws, Wp // ws, ws, ws, C).transpose(0, 1, 3, 2, 4, 5)
        a = a.reshape(B, Hp, Wp, C)[:, :H, :W, :]
    else:
        a = attention(xn.reshape(B, H * W, C)).reshape(B, H, W, C)
    x1 = shortcut + a
    xn2 = ln(x1, p['ln2_w'].reshape(-1), p['ln2_b'].reshape(-1))
    h = jax.nn.gelu(xn2 @ p['w1'] + p['b1'].reshape(-1), approximate=False)
    h = h @ p['w2'] + p['b2'].reshape(-1)
    return x1 + h


def make_params(key, dim, mlp_dim):
    ks = jax.random.split(key, 12)

    def lin(kw, kb, din, dout):
        # PyTorch Linear stores W as (out, in); pre-transposed to (in, out).
        w = (jax.random.normal(kw, (dout, din), jnp.float32) * 0.05).T
        b = (jax.random.normal(kb, (dout,), jnp.float32) * 0.05).reshape(1, dout)
        return w, b

    wqkv, bqkv = lin(ks[0], ks[1], dim, 3 * dim)
    wproj, bproj = lin(ks[2], ks[3], dim, dim)
    w1, b1 = lin(ks[4], ks[5], dim, mlp_dim)
    w2, b2 = lin(ks[6], ks[7], mlp_dim, dim)

    ln1_w = (1.0 + 0.1 * jax.random.normal(ks[8], (dim,), jnp.float32)).reshape(1, dim)
    ln1_b = (0.1 * jax.random.normal(ks[9], (dim,), jnp.float32)).reshape(1, dim)
    ln2_w = (1.0 + 0.1 * jax.random.normal(ks[10], (dim,), jnp.float32)).reshape(1, dim)
    ln2_b = (0.1 * jax.random.normal(ks[11], (dim,), jnp.float32)).reshape(1, dim)

    return dict(wqkv=wqkv, bqkv=bqkv, wproj=wproj, bproj=bproj,
                w1=w1, b1=b1, w2=w2, b2=b2,
                ln1_w=ln1_w, ln1_b=ln1_b, ln2_w=ln2_w, ln2_b=ln2_b)


if __name__ == "__main__":
    B, H, W, dim = 2, 8, 8, 32
    num_heads = 4
    mlp_dim = int(dim * 4.0)

    key = jax.random.PRNGKey(0)
    k_x, k_p = jax.random.split(key)
    x = jax.random.normal(k_x, (B, H, W, dim), jnp.float32)
    params = make_params(k_p, dim, mlp_dim)

    # (window_size, q_tile, kv_tile):
    #   ws=0 default tiles   -> global attention, single-pass kernel
    #   ws=4                 -> windowed, no padding
    #   ws=3                 -> windowed with SAM zero-padding (bias fill)
    #   ws=0 small tiles     -> exercises the online-softmax flash kernel (nk>1)
    cases = [(0, 256, 256), (4, 256, 256), (3, 256, 256), (0, 32, 32)]
    for ws, qt, kt in cases:
        out = block_forward(x, params, num_heads=num_heads, window_size=ws,
                            q_tile=qt, kv_tile=kt)
        out = jax.block_until_ready(out)
        ref = ref_block(x, params, num_heads, window_size=ws)
        assert out.shape == (B, H, W, dim)
        err = jnp.max(jnp.abs(out - ref))
        assert jnp.allclose(out, ref, atol=3e-2, rtol=3e-2), \
            f"window_size={ws} tiles=({qt},{kt}): max abs err {err}"

    print("KERNEL_OK")
</pallas_src>

<mosaic_0001>
module attributes {stable_mosaic.version = 11 : i64} {
  func.func @k(%arg0: i32, %arg1: memref<8x128xf32, #tpu.memory_space<vmem>>, %arg2: memref<8x128xf32, #tpu.memory_space<vmem>>, %arg3: memref<8x128xf32, #tpu.memory_space<vmem>>) attributes {dimension_semantics = [#tpu.dimension_semantics<arbitrary>], iteration_bounds = array<i64: 2>, scalar_prefetch = 0 : i64, scratch_operands = 0 : i64, tpu.core_type = #tpu.core_type<tc>, window_params = [{transform_indices = @transform_0, window_bounds = array<i64: 8, 128>}, {pipeline_mode = #tpu.pipeline_mode<synchronous>, transform_indices = @transform_1, window_bounds = array<i64: 8, 128>}, {transform_indices = @transform_2, window_bounds = array<i64: 8, 128>}]} {
    %c0 = arith.constant 0 : index
    %c0_0 = arith.constant 0 : index
    %0 = vector.load %arg1[%c0, %c0_0] : memref<8x128xf32, #tpu.memory_space<vmem>>, vector<8x128xf32>
    %c0_1 = arith.constant 0 : index
    %c0_2 = arith.constant 0 : index
    %1 = vector.load %arg2[%c0_1, %c0_2] : memref<8x128xf32, #tpu.memory_space<vmem>>, vector<8x128xf32>
    %2 = arith.addf %0, %1 : vector<8x128xf32>
    %c0_3 = arith.constant 0 : index
    %c0_4 = arith.constant 0 : index
    %3 = vector.load %arg3[%c0_3, %c0_4] : memref<8x128xf32, #tpu.memory_space<vmem>>, vector<8x128xf32>
    tpu.vector_store %arg3[%c0_3, %c0_4], %2 {strides = array<i32>} : memref<8x128xf32, #tpu.memory_space<vmem>>, vector<8x128xf32>,
    return
  }
  func.func @transform_0(%arg0: i32) -> (i32, i32) {
    %c0_i32 = arith.constant 0 : i32
    %c0_i32_0 = arith.constant 0 : i32
    return %arg0, %c0_i32 : i32, i32
  }
  func.func @transform_1(%arg0: i32) -> (i32, i32) {
    %c0_i32 = arith.constant 0 : i32
    %c0_i32_0 = arith.constant 0 : i32
    %c0_i32_1 = arith.constant 0 : i32
    return %c0_i32, %c0_i32_0 : i32, i32
  }
  func.func @transform_2(%arg0: i32) -> (i32, i32) {
    %c0_i32 = arith.constant 0 : i32
    %c0_i32_0 = arith.constant 0 : i32
    return %arg0, %c0_i32 : i32, i32
  }
}

module attributes {stable_mosaic.version = 11 : i64} {
  func.func @_ln_qkv_kernel(%arg0: i32, %arg1: memref<128x32xf32, #tpu.memory_space<vmem>>, %arg2: memref<1x32xf32, #tpu.memory_space<vmem>>, %arg3: memref<1x32xf32, #tpu.memory_space<vmem>>, %arg4: memref<32x96xbf16, #tpu.memory_space<vmem>>, %arg5: memref<1x96xf32, #tpu.memory_space<vmem>>, %arg6: memref<3x128x32xbf16, #tpu.memory_space<vmem>>) attributes {dimension_semantics = [#tpu.dimension_semantics<parallel>], iteration_bounds = array<i64: 1>, scalar_prefetch = 0 : i64, scratch_operands = 0 : i64, tpu.core_type = #tpu.core_type<tc>, window_params = [{transform_indices = @transform_0, window_bounds = array<i64: 128, 32>}, {pipeline_mode = #tpu.pipeline_mode<synchronous>, transform_indices = @transform_1, window_bounds = array<i64: 1, 32>}, {pipeline_mode = #tpu.pipeline_mode<synchronous>, transform_indices = @transform_2, window_bounds = array<i64: 1, 32>}, {pipeline_mode = #tpu.pipeline_mode<synchronous>, transform_indices = @transform_3, window_bounds = array<i64: 32, 96>}, {pipeline_mode = #tpu.pipeline_mode<synchronous>, transform_indices = @transform_4, window_bounds = array<i64: 1, 96>}, {transform_indices = @transform_5, window_bounds = array<i64: 3, 128, 32>}]} {
    %c0 = arith.constant 0 : index
    %c0_0 = arith.constant 0 : index
    %0 = vector.load %arg1[%c0, %c0_0] : memref<128x32xf32, #tpu.memory_space<vmem>>, vector<128x32xf32>
    %cst = arith.constant dense<0.000000e+00> : vector<128xf32>
    %1 = vector.multi_reduction <add>, %0, %cst [1] : vector<128x32xf32> to vector<128xf32>
    %2 = vector.shape_cast %1 : vector<128xf32> to vector<128x1xf32>
    %cst_1 = arith.constant 3.200000e+01 : f32
    %3 = vector.broadcast %cst_1 : f32 to vector<128x1xf32>
    %4 = arith.divf %2, %3 : vector<128x1xf32>
    %5 = vector.broadcast %4 : vector<128x1xf32> to vector<128x32xf32>
    %6 = arith.subf %0, %5 : vector<128x32xf32>
    %7 = arith.mulf %6, %6 : vector<128x32xf32>
    %cst_2 = arith.constant dense<0.000000e+00> : vector<128xf32>
    %8 = vector.multi_reduction <add>, %7, %cst_2 [1] : vector<128x32xf32> to vector<128xf32>
    %9 = vector.shape_cast %8 : vector<128xf32> to vector<128x1xf32>
    %cst_3 = arith.constant 3.200000e+01 : f32
    %10 = vector.broadcast %cst_3 : f32 to vector<128x1xf32>
    %11 = arith.divf %9, %10 : vector<128x1xf32>
    %12 = vector.broadcast %4 : vector<128x1xf32> to vector<128x32xf32>
    %13 = arith.subf %0, %12 : vector<128x32xf32>
    %cst_4 = arith.constant 9.99999974E-6 : f32
    %14 = vector.broadcast %cst_4 : f32 to vector<128x1xf32>
    %15 = arith.addf %11, %14 : vector<128x1xf32>
    %16 = math.rsqrt %15 : vector<128x1xf32>
    %17 = vector.broadcast %16 : vector<128x1xf32> to vector<128x32xf32>
    %18 = arith.mulf %13, %17 : vector<128x32xf32>
    %c0_5 = arith.constant 0 : index
    %c0_6 = arith.constant 0 : index
    %19 = vector.load %arg2[%c0_5, %c0_6] : memref<1x32xf32, #tpu.memory_space<vmem>>, vector<1x32xf32>
    %20 = vector.broadcast %19 : vector<1x32xf32> to vector<128x32xf32>
    %21 = arith.mulf %18, %20 : vector<128x32xf32>
    %c0_7 = arith.constant 0 : index
    %c0_8 = arith.constant 0 : index
    %22 = vector.load %arg3[%c0_7, %c0_8] : memref<1x32xf32, #tpu.memory_space<vmem>>, vector<1x32xf32>
    %23 = vector.broadcast %22 : vector<1x32xf32> to vector<128x32xf32>
    %24 = arith.addf %21, %23 : vector<128x32xf32>
    %25 = arith.truncf %24 : vector<128x32xf32> to vector<128x32xbf16>
    %c0_9 = arith.constant 0 : index
    %c0_10 = arith.constant 0 : index
    %26 = vector.load %arg4[%c0_9, %c0_10] : memref<32x96xbf16, #tpu.memory_space<vmem>>, vector<32x96xbf16>
    %cst_11 = arith.constant dense<0.000000e+00> : vector<128x96xf32>
    %27 = tpu.matmul %25, %26, %cst_11 {dimension_numbers = #tpu.dot_dimension_numbers<[1], [0], [0], [1], [0, 0, 1, 1], [], []>} : vector<128x32xbf16>, vector<32x96xbf16>, vector<128x96xf32> -> vector<128x96xf32>
    %c0_12 = arith.constant 0 : index
    %c0_13 = arith.constant 0 : index
    %28 = vector.load %arg5[%c0_12, %c0_13] : memref<1x96xf32, #tpu.memory_space<vmem>>, vector<1x96xf32>
    %29 = vector.broadcast %28 : vector<1x96xf32> to vector<128x96xf32>
    %30 = arith.addf %27, %29 : vector<128x96xf32>
    %31 = vector.extract_strided_slice %30 {offsets = [0, 0], sizes = [128, 32], strides = [1, 1]} : vector<128x96xf32> to vector<128x32xf32>
    %cst_14 = arith.constant 0.353553385 : f32
    %32 = vector.broadcast %cst_14 : f32 to vector<128x32xf32>
    %33 = arith.mulf %31, %32 : vector<128x32xf32>
    %34 = arith.truncf %33 : vector<128x32xf32> to vector<128x32xbf16>
    %c0_15 = arith.constant 0 : index
    %c0_16 = arith.constant 0 : index
    %c0_17 = arith.constant 0 : index
    %35 = vector.load %arg6[%c0_15, %c0_16, %c0_17] : memref<3x128x32xbf16, #tpu.memory_space<vmem>>, vector<1x128x32xbf16>
    %36 = vector.shape_cast %35 : vector<1x128x32xbf16> to vector<128x32xbf16>
    %37 = vector.shape_cast %34 : vector<128x32xbf16> to vector<1x128x32xbf16>
    tpu.vector_store %arg6[%c0_15, %c0_16, %c0_17], %37 {strides = array<i32>} : memref<3x128x32xbf16, #tpu.memory_space<vmem>>, vector<1x128x32xbf16>,
    %38 = vector.extract_strided_slice %30 {offsets = [0, 32], sizes = [128, 32], strides = [1, 1]} : vector<128x96xf32> to vector<128x32xf32>
    %39 = arith.truncf %38 : vector<128x32xf32> to vector<128x32xbf16>
    %c1 = arith.constant 1 : index
    %c0_18 = arith.constant 0 : index
    %c0_19 = arith.constant 0 : index
    %40 = vector.load %arg6[%c1, %c0_18, %c0_19] : memref<3x128x32xbf16, #tpu.memory_space<vmem>>, vector<1x128x32xbf16>
    %41 = vector.shape_cast %40 : vector<1x128x32xbf16> to vector<128x32xbf16>
    %42 = vector.shape_cast %39 : vector<128x32xbf16> to vector<1x128x32xbf16>
    tpu.vector_store %arg6[%c1, %c0_18, %c0_19], %42 {strides = array<i32>} : memref<3x128x32xbf16, #tpu.memory_space<vmem>>, vector<1x128x32xbf16>,
    %43 = vector.extract_strided_slice %30 {offsets = [0, 64], sizes = [128, 32], strides = [1, 1]} : vector<128x96xf32> to vector<128x32xf32>
    %44 = arith.truncf %43 : vector<128x32xf32> to vector<128x32xbf16>
    %c2 = arith.constant 2 : index
    %c0_20 = arith.constant 0 : index
    %c0_21 = arith.constant 0 : index
    %45 = vector.load %arg6[%c2, %c0_20, %c0_21] : memref<3x128x32xbf16, #tpu.memory_space<vmem>>, vector<1x128x32xbf16>
    %46 = vector.shape_cast %45 : vector<1x128x32xbf16> to vector<128x32xbf16>
    %47 = vector.shape_cast %44 : vector<128x32xbf16> to vector<1x128x32xbf16>
    tpu.vector_store %arg6[%c2, %c0_20, %c0_21], %47 {strides = array<i32>} : memref<3x128x32xbf16, #tpu.memory_space<vmem>>, vector<1x128x32xbf16>,
    return
  }
  func.func @transform_0(%arg0: i32) -> (i32, i32) {
    %c0_i32 = arith.constant 0 : i32
    %c0_i32_0 = arith.constant 0 : i32
    return %arg0, %c0_i32 : i32, i32
  }
  func.func @transform_1(%arg0: i32) -> (i32, i32) {
    %c0_i32 = arith.constant 0 : i32
    %c0_i32_0 = arith.constant 0 : i32
    %c0_i32_1 = arith.constant 0 : i32
    return %c0_i32, %c0_i32_0 : i32, i32
  }
  func.func @transform_2(%arg0: i32) -> (i32, i32) {
    %c0_i32 = arith.constant 0 : i32
    %c0_i32_0 = arith.constant 0 : i32
    %c0_i32_1 = arith.constant 0 : i32
    return %c0_i32, %c0_i32_0 : i32, i32
  }
  func.func @transform_3(%arg0: i32) -> (i32, i32) {
    %c0_i32 = arith.constant 0 : i32
    %c0_i32_0 = arith.constant 0 : i32
    %c0_i32_1 = arith.constant 0 : i32
    return %c0_i32, %c0_i32_0 : i32, i32
  }
  func.func @transform_4(%arg0: i32) -> (i32, i32) {
    %c0_i32 = arith.constant 0 : i32
    %c0_i32_0 = arith.constant 0 : i32
    %c0_i32_1 = arith.constant 0 : i32
    return %c0_i32, %c0_i32_0 : i32, i32
  }
  func.func @transform_5(%arg0: i32) -> (i32, i32, i32) {
    %c0_i32 = arith.constant 0 : i32
    %c0_i32_0 = arith.constant 0 : i32
    %c0_i32_1 = arith.constant 0 : i32
    return %c0_i32, %arg0, %c0_i32_0 : i32, i32, i32
  }
}

</mosaic_0001>

<llo_original>
// kernel: tpu_custom_call.1
$region0: #{tpu_custom_call.1}
  #allocation0 [shape = 'u32[]', space=smem, size = 0x4, offset = 0x4, fixed_abs, tag = 'smem constant byte address 0x4 - core index']
  #allocation1 [shape = 'u32[72,128]{1,0:T(1,128)}', space=vmem, size = 0x9000, scoped, tag = 'internal scratch']
  %s0 = inlined_call_operand.hbm [shape: f32[16,128], index: 0, kind: input, shape index: {}]
  %s1 = inlined_call_operand.hbm [shape: f32[8,128], index: 1, kind: input, shape index: {}]
  %s2 = inlined_call_operand.hbm [shape: f32[16,128], index: 2, kind: output, shape index: {}]
  %s3 = sld [smem:[#allocation0]]
  $region49: #{tpu_custom_call.1} parent=0
    _
  %s5 = ssub.s32 1, %s3
  %s6 = scalar_select 0, %s5, %s3
  $region1: #{tpu_custom_call.1} parent=0
    #allocation2 [shape = 'u8[8192]{0}', space=vmem, size = 0x2000, scoped, tag = 'input window, operand 0']
    #allocation3 [shape = 's32[2]{0}', space=sflag, size = 0x8, scoped, tag = 'scoped memory for tpu_custom_call.1']
    #allocation4 [shape = 's32[2]{0}', space=sflag, size = 0x8, scoped, tag = 'scoped memory for tpu_custom_call.1']
    #allocation5 [shape = 'u8[4096]{0}', space=vmem, size = 0x1000, scoped, tag = 'input window, operand 1, single buffered']
    #allocation6 [shape = 's32[1]{0}', space=sflag, size = 0x4, scoped, tag = 'scoped memory for tpu_custom_call.1']
    #allocation7 [shape = 'u8[8192]{0}', space=vmem, size = 0x2000, scoped, tag = 'output window, operand 0']
    %7 = vsyncpa [#allocation3], 0
    %s8 = scalar_lea.sflag [#allocation3], 1
    %9 = vsyncpa %s8, 0
    %10 = vsyncpa [#allocation6], 0
    %11 = vsyncpa [#allocation4], 0
    %s12 = scalar_lea.sflag [#allocation4], 1
    %13 = vsyncpa %s12, 0
    loop: start=0, step=1, limit=4
    $region2: #{tpu_custom_call.1} parent=1 // loop_pre_header
      _
    $region3: #{tpu_custom_call.1} parent=1 // loop_header
      %s15 = sphi 0, %s19
      %p16 = scmp.ge.s32.totalorder %s15, 4
      %s25 = sphi 0, %s27
      %s28 = sphi 0, %s25
      %s29 = sphi 0, %s28
      %s45 = sphi 0, %s29
      %s49 = sphi 0, %s49
      %s51 = sphi 0, %s49
      %s52 = sphi 0, %s51
      %s66 = sphi 0, %s52
      %s72 = sphi 0, %s74
      %s75 = sphi 0, %s72
      %s76 = sphi 0, %s75
      %s92 = sphi 0, %s76
    $region4: #{tpu_custom_call.1} parent=1 // loop_header_branch
      %18 = sbr.rel (%p16) target = $region8
    $region5: #{tpu_custom_call.1} parent=1 // loop_body
      %s20 = ssub.s32 %s15, 1
      %s21 = ssub.s32 %s15, 2
      %s22 = sadd.s32 %s15, 1
      %s23 = ssub.s32 %s15, %s22
      %p24 = scmp.eq.s32.totalorder %s23, 0
      %s26 = sadd.s32 %s25, 1
      %s27 = scalar_select %p24, %s25, %s26
      %p30 = pneg %p24
      %p31 = scmp.eq.s32.totalorder %s15, 1
      %p32 = por %p30, %p31
      %p33 = scmp.ne.s32.totalorder %s25, %s28
      %p34 = scmp.eq.s32.totalorder %s15, 0
      %p35 = por %p33, %p34
      %p36 = scmp.ne.s32.totalorder %s25, %s28
      %p37 = scmp.eq.s32.totalorder %s20, 1
      %p38 = por %p36, %p37
      %p39 = scmp.ne.s32.totalorder %s28, %s29
      %p40 = scmp.eq.s32.totalorder %s20, 0
      %p41 = por %p39, %p40
      %p42 = scmp.ne.s32.totalorder %s28, %s29
      %p43 = scmp.eq.s32.totalorder %s21, 1
      %p44 = por %p42, %p43
      %p46 = scmp.ne.s32.totalorder %s29, %s45
      %p47 = scmp.eq.s32.totalorder %s21, 0
      %p48 = por %p46, %p47
      %s50 = sadd.s32 %s49, 1
      %p53 = scmp.eq.s32.totalorder %s15, 1
      %p54 = scmp.ne.s32.totalorder %s49, %s51
      %p55 = scmp.eq.s32.totalorder %s15, 0
      %p56 = por %p54, %p55
      %p57 = scmp.ne.s32.totalorder %s49, %s51
      %p58 = scmp.eq.s32.totalorder %s20, 1
      %p59 = por %p57, %p58
      %p60 = scmp.ne.s32.totalorder %s51, %s52
      %p61 = scmp.eq.s32.totalorder %s20, 0
      %p62 = por %p60, %p61
      %p63 = scmp.ne.s32.totalorder %s51, %s52
      %p64 = scmp.eq.s32.totalorder %s21, 1
      %p65 = por %p63, %p64
      %p67 = scmp.ne.s32.totalorder %s52, %s66
      %p68 = scmp.eq.s32.totalorder %s21, 0
      %p69 = por %p67, %p68
      %s70 = ssub.s32 %s15, %s22
      %p71 = scmp.eq.s32.totalorder %s70, 0
      %s73 = sadd.s32 %s72, 1
      %s74 = scalar_select %p71, %s72, %s73
      %p77 = pneg %p71
      %p78 = scmp.eq.s32.totalorder %s15, 1
      %p79 = por %p77, %p78
      %p80 = scmp.ne.s32.totalorder %s72, %s75
      %p81 = scmp.eq.s32.totalorder %s15, 0
      %p82 = por %p80, %p81
      %p83 = scmp.ne.s32.totalorder %s72, %s75
      %p84 = scmp.eq.s32.totalorder %s20, 1
      %p85 = por %p83, %p84
      %p86 = scmp.ne.s32.totalorder %s75, %s76
      %p87 = scmp.eq.s32.totalorder %s20, 0
      %p88 = por %p86, %p87
      %p89 = scmp.ne.s32.totalorder %s75, %s76
      %p90 = scmp.eq.s32.totalorder %s21, 1
      %p91 = por %p89, %p90
      %p93 = scmp.ne.s32.totalorder %s76, %s92
      %p94 = scmp.eq.s32.totalorder %s21, 0
      %p95 = por %p93, %p94
      %p96 = scmp.le.s32.totalorder 1, %s15
      %p97 = scmp.lt.s32.totalorder %s15, 3
      %p98 = pnand %p96, %p97
      %p99 = pneg %p98
      // Predicated region
      $region9: #{tpu_custom_call.1} parent=5 // pred_check
        _
      $region10: #{tpu_custom_call.1} parent=5 // pred_check_branch
        %101 = sbr.rel (%p98) target = $region12
      $region11: #{tpu_custom_call.1} parent=5 // pred_region
        %s102 = ssub.s32 %s15, 1
        // Predicated region
        $region13: #{tpu_custom_call.1} parent=11 // pred_check
          %p103 = pneg %p62
        $region14: #{tpu_custom_call.1} parent=11 // pred_check_branch
          %105 = sbr.rel (%p103) target = $region16
        $region15: #{tpu_custom_call.1} parent=11 // pred_region
          %107 = vsyncadd [#allocation6], 0
          %s109 = sshll.u32 %s1, 4
          %s110 = int_to_ptr.hbm [resolvable:$true] %s109
          %s111 = sshll.u32 [#allocation5], 4
          %s112 = int_to_ptr.vmem [resolvable:$true] %s111
          %114 = dma.hbm_to_vmem [thread:$0]  %s110, 128, %s112, [#allocation6]
        $region16: #{tpu_custom_call.1} parent=11 // pred_fallthru
          _
      $region12: #{tpu_custom_call.1} parent=5 // pred_fallthru
        _
      %p115 = scmp.lt.s32.totalorder %s15, 2
      // Predicated region
      $region17: #{tpu_custom_call.1} parent=5 // pred_check
        %p116 = pneg %p115
      $region18: #{tpu_custom_call.1} parent=5 // pred_check_branch
        %118 = sbr.rel (%p116) target = $region20
      $region19: #{tpu_custom_call.1} parent=5 // pred_region
        // Predicated region
        $region21: #{tpu_custom_call.1} parent=19 // pred_check
          %p119 = pneg %p35
        $region22: #{tpu_custom_call.1} parent=19 // pred_check_branch
          %121 = sbr.rel (%p119) target = $region24
        $region23: #{tpu_custom_call.1} parent=19 // pred_region
          %s122 = sand.u32 %s25, 1
          %s123 = scalar_lea.sflag [#allocation3], %s122
          %s124 = sand.u32 %s25, 1
          %s125 = smul.addr %s124, 8
          %s126 = scalar_lea.vmem [#allocation2], %s125
          %128 = vsyncadd %s123, 0
          %s129 = smul.addr %s15, 8
          %s130 = scalar_lea.hbm %s0, %s129
          %s132 = sshll.u32 %s130, 4
          %s133 = int_to_ptr.hbm [resolvable:$true] %s132
          %s134 = sshll.u32 %s126, 4
          %s135 = int_to_ptr.vmem [resolvable:$true] %s134
          %137 = dma.hbm_to_vmem [thread:$0]  %s133, 128, %s135, %s123
        $region24: #{tpu_custom_call.1} parent=19 // pred_fallthru
          _
      $region20: #{tpu_custom_call.1} parent=5 // pred_fallthru
        _
      %p138 = scmp.le.s32.totalorder 1, %s15
      %p139 = scmp.lt.s32.totalorder %s15, 3
      %p140 = pnand %p138, %p139
      %p141 = pneg %p140
      // Predicated region
      $region25: #{tpu_custom_call.1} parent=5 // pred_check
        _
      $region26: #{tpu_custom_call.1} parent=5 // pred_check_branch
        %143 = sbr.rel (%p140) target = $region28
      $region27: #{tpu_custom_call.1} parent=5 // pred_region
        %s144 = ssub.s32 %s15, 1
        %s145 = sand.u32 %s28, 1
        %s146 = scalar_lea.sflag [#allocation3], %s145
        %s147 = sand.u32 %s28, 1
        %s148 = smul.addr %s147, 8
        %s149 = scalar_lea.vmem [#allocation2], %s148
        // Predicated region
        $region29: #{tpu_custom_call.1} parent=27 // pred_check
          %p150 = pneg %p41
        $region30: #{tpu_custom_call.1} parent=27 // pred_check_branch
          %152 = sbr.rel (%p150) target = $region32
        $region31: #{tpu_custom_call.1} parent=27 // pred_region
          %154 = dma.done %s146, 128
        $region32: #{tpu_custom_call.1} parent=27 // pred_fallthru
          _
        // Predicated region
        $region33: #{tpu_custom_call.1} parent=27 // pred_check
          %p155 = pneg %p62
        $region34: #{tpu_custom_call.1} parent=27 // pred_check_branch
          %157 = sbr.rel (%p155) target = $region36
        $region35: #{tpu_custom_call.1} parent=27 // pred_region
          %159 = dma.done [#allocation6], 128
        $region36: #{tpu_custom_call.1} parent=27 // pred_fallthru
          _
        %s160 = sand.u32 %s28, 1
        %s161 = scalar_lea.sflag [#allocation3], %s160
        %s162 = sand.u32 %s28, 1
        %s163 = smul.addr %s162, 8
        %s164 = scalar_lea.vmem [#allocation2], %s163
        %p165 = pneg %p41
        %p166 = pneg %p38
        %p167 = pneg %p62
        %p168 = pneg %p59
        %p169 = pneg %p88
        %p170 = pneg %p85
        %s171 = sand.u32 %s75, 1
        %s172 = scalar_lea.sflag [#allocation4], %s171
        %s173 = sand.u32 %s75, 1
        %s174 = smul.addr %s173, 8
        %s175 = scalar_lea.vmem [#allocation7], %s174
        %v176 = vld [vmem:[%s149] sm:$0xff]
        %v177 = vld [vmem:[#allocation5] sm:$0xff]
        %v178 = vadd.f32 %v176, %v177
        %179 = vst [vmem:[%s175] sm:$0xff] %v178
        %s180 = sand.u32 %s75, 1
        %s181 = scalar_lea.sflag [#allocation4], %s180
        %s182 = sand.u32 %s75, 1
        %s183 = smul.addr %s182, 8
        %s184 = scalar_lea.vmem [#allocation7], %s183
        // Predicated region
        $region37: #{tpu_custom_call.1} parent=27 // pred_check
          %p185 = pneg %p85
        $region38: #{tpu_custom_call.1} parent=27 // pred_check_branch
          %187 = sbr.rel (%p185) target = $region40
        $region39: #{tpu_custom_call.1} parent=27 // pred_region
          %189 = vsyncadd %s181, 0
          %s190 = smul.addr %s20, 8
          %s191 = scalar_lea.hbm %s2, %s190
          %s193 = sshll.u32 %s184, 4
          %s194 = int_to_ptr.vmem [resolvable:$true] %s193
          %s195 = sshll.u32 %s191, 4
          %s196 = int_to_ptr.hbm [resolvable:$true] %s195
          %198 = dma.vmem_to_hbm [thread:$0]  %s194, 128, %s196, %s181
        $region40: #{tpu_custom_call.1} parent=27 // pred_fallthru
          _
      $region28: #{tpu_custom_call.1} parent=5 // pred_fallthru
        _
      %p199 = scmp.le.s32.totalorder 2, %s15
      // Predicated region
      $region41: #{tpu_custom_call.1} parent=5 // pred_check
        %p200 = pneg %p199
      $region42: #{tpu_custom_call.1} parent=5 // pred_check_branch
        %202 = sbr.rel (%p200) target = $region44
      $region43: #{tpu_custom_call.1} parent=5 // pred_region
        %s203 = ssub.s32 %s15, 2
        // Predicated region
        $region45: #{tpu_custom_call.1} parent=43 // pred_check
          %p204 = pneg %p91
        $region46: #{tpu_custom_call.1} parent=43 // pred_check_branch
          %206 = sbr.rel (%p204) target = $region48
        $region47: #{tpu_custom_call.1} parent=43 // pred_region
          %s207 = sand.u32 %s76, 1
          %s208 = scalar_lea.sflag [#allocation4], %s207
          %s209 = sand.u32 %s76, 1
          %s210 = smul.addr %s209, 8
          %s211 = scalar_lea.vmem [#allocation7], %s210
          %213 = dma.done %s208, 128
        $region48: #{tpu_custom_call.1} parent=43 // pred_fallthru
          _
      $region44: #{tpu_custom_call.1} parent=5 // pred_fallthru
        _
    $region6: #{tpu_custom_call.1} parent=1 // loop_footer
      %s19 = sadd.s32 1, %s15
    $region7: #{tpu_custom_call.1} parent=1 // loop_footer_branch
      %14 = sbr.rel target = $region3
    $region8: #{tpu_custom_call.1} parent=1 // loop_exit
      _
    %214 = vsyncpa [#allocation3], 1
    %s215 = scalar_lea.sflag [#allocation3], 1
    %216 = vsyncpa %s215, 1
    %217 = vsyncpa [#allocation6], 1
    %218 = vsyncpa [#allocation4], 1
    %s219 = scalar_lea.sflag [#allocation4], 1
    %220 = vsyncpa %s219, 1

// kernel: tpu_custom_call.1
$region0: #{tpu_custom_call.1}
  #allocation0 [shape = 'u32[]', space=smem, size = 0x4, offset = 0x4, fixed_abs, tag = 'smem constant byte address 0x4 - core index']
  #allocation1 [shape = 'u32[72,128]{1,0:T(1,128)}', space=vmem, size = 0x9000, scoped, tag = 'internal scratch']
  %s0 = inlined_call_operand.vmem [shape: f32[128,32], index: 0, kind: input, shape index: {}]
  %s1 = inlined_call_operand.vmem [shape: f32[1,32], index: 1, kind: input, shape index: {}]
  %s2 = inlined_call_operand.vmem [shape: f32[1,32], index: 2, kind: input, shape index: {}]
  %s3 = inlined_call_operand.vmem [shape: bf16[32,96], index: 3, kind: input, shape index: {}]
  %s4 = inlined_call_operand.vmem [shape: f32[1,96], index: 4, kind: input, shape index: {}]
  %s5 = inlined_call_operand.vmem [shape: bf16[3,128,32], index: 5, kind: output, shape index: {}]
  %s6 = sld [smem:[#allocation0]]
  $region30: #{tpu_custom_call.1} parent=0
    _
  %s8 = ssub.s32 1, %s6
  %s9 = scalar_select 0, %s8, %s6
  // Predicated region
  $region2: #{tpu_custom_call.1} parent=0 // pred_check
    _
  $region3: #{tpu_custom_call.1} parent=0 // pred_check_branch
    %11 = sbr.rel (0) target = $region5
  $region4: #{tpu_custom_call.1} parent=0 // pred_region
    _
  $region5: #{tpu_custom_call.1} parent=0 // pred_fallthru
    _
  // Predicated region
  $region6: #{tpu_custom_call.1} parent=0 // pred_check
    _
  $region7: #{tpu_custom_call.1} parent=0 // pred_check_branch
    %13 = sbr.rel (0) target = $region9
  $region8: #{tpu_custom_call.1} parent=0 // pred_region
    _
  $region9: #{tpu_custom_call.1} parent=0 // pred_fallthru
    _
  // Predicated region
  $region10: #{tpu_custom_call.1} parent=0 // pred_check
    _
  $region11: #{tpu_custom_call.1} parent=0 // pred_check_branch
    %15 = sbr.rel (0) target = $region13
  $region12: #{tpu_custom_call.1} parent=0 // pred_region
    _
  $region13: #{tpu_custom_call.1} parent=0 // pred_fallthru
    _
  // Predicated region
  $region14: #{tpu_custom_call.1} parent=0 // pred_check
    _
  $region15: #{tpu_custom_call.1} parent=0 // pred_check_branch
    %17 = sbr.rel (0) target = $region17
  $region16: #{tpu_custom_call.1} parent=0 // pred_region
    _
  $region17: #{tpu_custom_call.1} parent=0 // pred_fallthru
    _
  // Predicated region
  $region18: #{tpu_custom_call.1} parent=0 // pred_check
    _
  $region19: #{tpu_custom_call.1} parent=0 // pred_check_branch
    %19 = sbr.rel (0) target = $region21
  $region20: #{tpu_custom_call.1} parent=0 // pred_region
    _
  $region21: #{tpu_custom_call.1} parent=0 // pred_fallthru
    _
  %v21 = vld [vmem:[%s0] sm:$0xff]
  %v22 = vld [vmem:[%s0 + $0x8] sm:$0xff]
  %v23 = vld [vmem:[%s0 + $0x10] sm:$0xff]
  %v24 = vld [vmem:[%s0 + $0x18] sm:$0xff]
  %v25 = vld [vmem:[%s0 + $0x20] sm:$0xff]
  %v26 = vld [vmem:[%s0 + $0x28] sm:$0xff]
  %v27 = vld [vmem:[%s0 + $0x30] sm:$0xff]
  %v28 = vld [vmem:[%s0 + $0x38] sm:$0xff]
  %v29 = vld [vmem:[%s0 + $0x40] sm:$0xff]
  %v30 = vld [vmem:[%s0 + $0x48] sm:$0xff]
  %v31 = vld [vmem:[%s0 + $0x50] sm:$0xff]
  %v32 = vld [vmem:[%s0 + $0x58] sm:$0xff]
  %v33 = vld [vmem:[%s0 + $0x60] sm:$0xff]
  %v34 = vld [vmem:[%s0 + $0x68] sm:$0xff]
  %v35 = vld [vmem:[%s0 + $0x70] sm:$0xff]
  %v36 = vld [vmem:[%s0 + $0x78] sm:$0xff]
  %vm37 = vcmask 261120
  %v38 = vsel %vm37, %v21, 0.0
  %39 = vadd.xlane.f32.xlu0 %v38
  %v40 = vpop.xlane.xlu0 %39
  %v41 = vsel %vm37, %v22, 0.0
  %42 = vadd.xlane.f32.xlu0 %v41
  %v43 = vpop.xlane.xlu0 %42
  %v44 = vsel %vm37, %v23, 0.0
  %45 = vadd.xlane.f32.xlu0 %v44
  %v46 = vpop.xlane.xlu0 %45
  %v47 = vsel %vm37, %v24, 0.0
  %48 = vadd.xlane.f32.xlu0 %v47
  %v49 = vpop.xlane.xlu0 %48
  %v50 = vsel %vm37, %v25, 0.0
  %51 = vadd.xlane.f32.xlu0 %v50
  %v52 = vpop.xlane.xlu0 %51
  %v53 = vsel %vm37, %v26, 0.0
  %54 = vadd.xlane.f32.xlu0 %v53
  %v55 = vpop.xlane.xlu0 %54
  %v56 = vsel %vm37, %v27, 0.0
  %57 = vadd.xlane.f32.xlu0 %v56
  %v58 = vpop.xlane.xlu0 %57
  %v59 = vsel %vm37, %v28, 0.0
  %60 = vadd.xlane.f32.xlu0 %v59
  %v61 = vpop.xlane.xlu0 %60
  %v62 = vsel %vm37, %v29, 0.0
  %63 = vadd.xlane.f32.xlu0 %v62
  %v64 = vpop.xlane.xlu0 %63
  %v65 = vsel %vm37, %v30, 0.0
  %66 = vadd.xlane.f32.xlu0 %v65
  %v67 = vpop.xlane.xlu0 %66
  %v68 = vsel %vm37, %v31, 0.0
  %69 = vadd.xlane.f32.xlu0 %v68
  %v70 = vpop.xlane.xlu0 %69
  %v71 = vsel %vm37, %v32, 0.0
  %72 = vadd.xlane.f32.xlu0 %v71
  %v73 = vpop.xlane.xlu0 %72
  %v74 = vsel %vm37, %v33, 0.0
  %75 = vadd.xlane.f32.xlu0 %v74
  %v76 = vpop.xlane.xlu0 %75
  %v77 = vsel %vm37, %v34, 0.0
  %78 = vadd.xlane.f32.xlu0 %v77
  %v79 = vpop.xlane.xlu0 %78
  %v80 = vsel %vm37, %v35, 0.0
  %81 = vadd.xlane.f32.xlu0 %v80
  %v82 = vpop.xlane.xlu0 %81
  %v83 = vsel %vm37, %v36, 0.0
  %84 = vadd.xlane.f32.xlu0 %v83
  %v85 = vpop.xlane.xlu0 %84
  %v86 = vrcp.pop 32.0
  %v87 = vmul.f32 32.0, %v86
  %v88 = vsub.f32 1.0, %v87
  %v89 = vmul.f32 %v86, %v88
  %v90 = vadd.f32 %v86, %v89
  %vm91 = vweird.f32 %v86
  %v92 = vsel %vm91, %v86, %v90
  %v93 = vmul.f32 %v40, %v92
  %v94 = vmul.f32 %v43, %v92
  %v95 = vmul.f32 %v46, %v92
  %v96 = vmul.f32 %v49, %v92
  %v97 = vmul.f32 %v52, %v92
  %v98 = vmul.f32 %v55, %v92
  %v99 = vmul.f32 %v58, %v92
  %v100 = vmul.f32 %v61, %v92
  %v101 = vmul.f32 %v64, %v92
  %v102 = vmul.f32 %v67, %v92
  %v103 = vmul.f32 %v70, %v92
  %v104 = vmul.f32 %v73, %v92
  %v105 = vmul.f32 %v76, %v92
  %v106 = vmul.f32 %v79, %v92
  %v107 = vmul.f32 %v82, %v92
  %v108 = vmul.f32 %v85, %v92
  %v109 = vsub.f32 %v21, %v93
  %v110 = vsub.f32 %v22, %v94
  %v111 = vsub.f32 %v23, %v95
  %v112 = vsub.f32 %v24, %v96
  %v113 = vsub.f32 %v25, %v97
  %v114 = vsub.f32 %v26, %v98
  %v115 = vsub.f32 %v27, %v99
  %v116 = vsub.f32 %v28, %v100
  %v117 = vsub.f32 %v29, %v101
  %v118 = vsub.f32 %v30, %v102
  %v119 = vsub.f32 %v31, %v103
  %v120 = vsub.f32 %v32, %v104
  %v121 = vsub.f32 %v33, %v105
  %v122 = vsub.f32 %v34, %v106
  %v123 = vsub.f32 %v35, %v107
  %v124 = vsub.f32 %v36, %v108
  %v125 = vmul.f32 %v109, %v109
  %v126 = vmul.f32 %v110, %v110
  %v127 = vmul.f32 %v111, %v111
  %v128 = vmul.f32 %v112, %v112
  %v129 = vmul.f32 %v113, %v113
  %v130 = vmul.f32 %v114, %v114
  %v131 = vmul.f32 %v115, %v115
  %v132 = vmul.f32 %v116, %v116
  %v133 = vmul.f32 %v117, %v117
  %v134 = vmul.f32 %v118, %v118
  %v135 = vmul.f32 %v119, %v119
  %v136 = vmul.f32 %v120, %v120
  %v137 = vmul.f32 %v121, %v121
  %v138 = vmul.f32 %v122, %v122
  %v139 = vmul.f32 %v123, %v123
  %v140 = vmul.f32 %v124, %v124
  %v141 = vsel %vm37, %v125, 0.0
  %142 = vadd.xlane.f32.xlu0 %v141
  %v143 = vpop.xlane.xlu0 %142
  %v144 = vsel %vm37, %v126, 0.0
  %145 = vadd.xlane.f32.xlu0 %v144
  %v146 = vpop.xlane.xlu0 %145
  %v147 = vsel %vm37, %v127, 0.0
  %148 = vadd.xlane.f32.xlu0 %v147
  %v149 = vpop.xlane.xlu0 %148
  %v150 = vsel %vm37, %v128, 0.0
  %151 = vadd.xlane.f32.xlu0 %v150
  %v152 = vpop.xlane.xlu0 %151
  %v153 = vsel %vm37, %v129, 0.0
  %154 = vadd.xlane.f32.xlu0 %v153
  %v155 = vpop.xlane.xlu0 %154
  %v156 = vsel %vm37, %v130, 0.0
  %157 = vadd.xlane.f32.xlu0 %v156
  %v158 = vpop.xlane.xlu0 %157
  %v159 = vsel %vm37, %v131, 0.0
  %160 = vadd.xlane.f32.xlu0 %v159
  %v161 = vpop.xlane.xlu0 %160
  %v162 = vsel %vm37, %v132, 0.0
  %163 = vadd.xlane.f32.xlu0 %v162
  %v164 = vpop.xlane.xlu0 %163
  %v165 = vsel %vm37, %v133, 0.0
  %166 = vadd.xlane.f32.xlu0 %v165
  %v167 = vpop.xlane.xlu0 %166
  %v168 = vsel %vm37, %v134, 0.0
  %169 = vadd.xlane.f32.xlu0 %v168
  %v170 = vpop.xlane.xlu0 %169
  %v171 = vsel %vm37, %v135, 0.0
  %172 = vadd.xlane.f32.xlu0 %v171
  %v173 = vpop.xlane.xlu0 %172
  %v174 = vsel %vm37, %v136, 0.0
  %175 = vadd.xlane.f32.xlu0 %v174
  %v176 = vpop.xlane.xlu0 %175
  %v177 = vsel %vm37, %v137, 0.0
  %178 = vadd.xlane.f32.xlu0 %v177
  %v179 = vpop.xlane.xlu0 %178
  %v180 = vsel %vm37, %v138, 0.0
  %181 = vadd.xlane.f32.xlu0 %v180
  %v182 = vpop.xlane.xlu0 %181
  %v183 = vsel %vm37, %v139, 0.0
  %184 = vadd.xlane.f32.xlu0 %v183
  %v185 = vpop.xlane.xlu0 %184
  %v186 = vsel %vm37, %v140, 0.0
  %187 = vadd.xlane.f32.xlu0 %v186
  %v188 = vpop.xlane.xlu0 %187
  %v189 = vmul.f32 %v143, %v92
  %v190 = vmul.f32 %v146, %v92
  %v191 = vmul.f32 %v149, %v92
  %v192 = vmul.f32 %v152, %v92
  %v193 = vmul.f32 %v155, %v92
  %v194 = vmul.f32 %v158, %v92
  %v195 = vmul.f32 %v161, %v92
  %v196 = vmul.f32 %v164, %v92
  %v197 = vmul.f32 %v167, %v92
  %v198 = vmul.f32 %v170, %v92
  %v199 = vmul.f32 %v173, %v92
  %v200 = vmul.f32 %v176, %v92
  %v201 = vmul.f32 %v179, %v92
  %v202 = vmul.f32 %v182, %v92
  %v203 = vmul.f32 %v185, %v92
  %v204 = vmul.f32 %v188, %v92
  %v205 = vadd.f32 %v189, 1e-05
  %v206 = vadd.f32 %v190, 1e-05
  %v207 = vadd.f32 %v191, 1e-05
  %v208 = vadd.f32 %v192, 1e-05
  %v209 = vadd.f32 %v193, 1e-05
  %v210 = vadd.f32 %v194, 1e-05
  %v211 = vadd.f32 %v195, 1e-05
  %v212 = vadd.f32 %v196, 1e-05
  %v213 = vadd.f32 %v197, 1e-05
  %v214 = vadd.f32 %v198, 1e-05
  %v215 = vadd.f32 %v199, 1e-05
  %v216 = vadd.f32 %v200, 1e-05
  %v217 = vadd.f32 %v201, 1e-05
  %v218 = vadd.f32 %v202, 1e-05
  %v219 = vadd.f32 %v203, 1e-05
  %v220 = vadd.f32 %v204, 1e-05
  %v221 = vrsqrt.pop %v205
  %v222 = vmul.f32 %v221, %v205
  %v223 = vmul.f32 %v222, %v221
  %v224 = vmul.f32 0.5, %v223
  %v225 = vsub.f32 1.5, %v224
  %v226 = vmul.f32 %v221, %v225
  %vm227 = vweird.f32 %v205
  %vm228 = vweird.f32 %v221
  %vm229 = vmor %vm227, %vm228
  %v230 = vsel %vm229, %v221, %v226
  %v231 = vrsqrt.pop %v206
  %v232 = vmul.f32 %v231, %v206
  %v233 = vmul.f32 %v232, %v231
  %v234 = vmul.f32 0.5, %v233
  %v235 = vsub.f32 1.5, %v234
  %v236 = vmul.f32 %v231, %v235
  %vm237 = vweird.f32 %v206
  %vm238 = vweird.f32 %v231
  %vm239 = vmor %vm237, %vm238
  %v240 = vsel %vm239, %v231, %v236
  %v241 = vrsqrt.pop %v207
  %v242 = vmul.f32 %v241, %v207
  %v243 = vmul.f32 %v242, %v241
  %v244 = vmul.f32 0.5, %v243
  %v245 = vsub.f32 1.5, %v244
  %v246 = vmul.f32 %v241, %v245
  %vm247 = vweird.f32 %v207
  %vm248 = vweird.f32 %v241
  %vm249 = vmor %vm247, %vm248
  %v250 = vsel %vm249, %v241, %v246
  %v251 = vrsqrt.pop %v208
  %v252 = vmul.f32 %v251, %v208
  %v253 = vmul.f32 %v252, %v251
  %v254 = vmul.f32 0.5, %v253
  %v255 = vsub.f32 1.5, %v254
  %v256 = vmul.f32 %v251, %v255
  %vm257 = vweird.f32 %v208
  %vm258 = vweird.f32 %v251
  %vm259 = vmor %vm257, %vm258
  %v260 = vsel %vm259, %v251, %v256
  %v261 = vrsqrt.pop %v209
  %v262 = vmul.f32 %v261, %v209
  %v263 = vmul.f32 %v262, %v261
  %v264 = vmul.f32 0.5, %v263
  %v265 = vsub.f32 1.5, %v264
  %v266 = vmul.f32 %v261, %v265
  %vm267 = vweird.f32 %v209
  %vm268 = vweird.f32 %v261
  %vm269 = vmor %vm267, %vm268
  %v270 = vsel %vm269, %v261, %v266
  %v271 = vrsqrt.pop %v210
  %v272 = vmul.f32 %v271, %v210
  %v273 = vmul.f32 %v272, %v271
  %v274 = vmul.f32 0.5, %v273
  %v275 = vsub.f32 1.5, %v274
  %v276 = vmul.f32 %v271, %v275
  %vm277 = vweird.f32 %v210
  %vm278 = vweird.f32 %v271
  %vm279 = vmor %vm277, %vm278
  %v280 = vsel %vm279, %v271, %v276
  %v281 = vrsqrt.pop %v211
  %v282 = vmul.f32 %v281, %v211
  %v283 = vmul.f32 %v282, %v281
  %v284 = vmul.f32 0.5, %v283
  %v285 = vsub.f32 1.5, %v284
  %v286 = vmul.f32 %v281, %v285
  %vm287 = vweird.f32 %v211
  %vm288 = vweird.f32 %v281
  %vm289 = vmor %vm287, %vm288
  %v290 = vsel %vm289, %v281, %v286
  %v291 = vrsqrt.pop %v212
  %v292 = vmul.f32 %v291, %v212
  %v293 = vmul.f32 %v292, %v291
  %v294 = vmul.f32 0.5, %v293
  %v295 = vsub.f32 1.5, %v294
  %v296 = vmul.f32 %v291, %v295
  %vm297 = vweird.f32 %v212
  %vm298 = vweird.f32 %v291
  %vm299 = vmor %vm297, %vm298
  %v300 = vsel %vm299, %v291, %v296
  %v301 = vrsqrt.pop %v213
  %v302 = vmul.f32 %v301, %v213
  %v303 = vmul.f32 %v302, %v301
  %v304 = vmul.f32 0.5, %v303
  %v305 = vsub.f32 1.5, %v304
  %v306 = vmul.f32 %v301, %v305
  %vm307 = vweird.f32 %v213
  %vm308 = vweird.f32 %v301
  %vm309 = vmor %vm307, %vm308
  %v310 = vsel %vm309, %v301, %v306
  %v311 = vrsqrt.pop %v214
  %v312 = vmul.f32 %v311, %v214
  %v313 = vmul.f32 %v312, %v311
  %v314 = vmul.f32 0.5, %v313
  %v315 = vsub.f32 1.5, %v314
  %v316 = vmul.f32 %v311, %v315
  %vm317 = vweird.f32 %v214
  %vm318 = vweird.f32 %v311
  %vm319 = vmor %vm317, %vm318
  %v320 = vsel %vm319, %v311, %v316
  %v321 = vrsqrt.pop %v215
  %v322 = vmul.f32 %v321, %v215
  %v323 = vmul.f32 %v322, %v321
  %v324 = vmul.f32 0.5, %v323
  %v325 = vsub.f32 1.5, %v324
  %v326 = vmul.f32 %v321, %v325
  %vm327 = vweird.f32 %v215
  %vm328 = vweird.f32 %v321
  %vm329 = vmor %vm327, %vm328
  %v330 = vsel %vm329, %v321, %v326
  %v331 = vrsqrt.pop %v216
  %v332 = vmul.f32 %v331, %v216
  %v333 = vmul.f32 %v332, %v331
  %v334 = vmul.f32 0.5, %v333
  %v335 = vsub.f32 1.5, %v334
  %v336 = vmul.f32 %v331, %v335
  %vm337 = vweird.f32 %v216
  %vm338 = vweird.f32 %v331
  %vm339 = vmor %vm337, %vm338
  %v340 = vsel %vm339, %v331, %v336
  %v341 = vrsqrt.pop %v217
  %v342 = vmul.f32 %v341, %v217
  %v343 = vmul.f32 %v342, %v341
  %v344 = vmul.f32 0.5, %v343
  %v345 = vsub.f32 1.5, %v344
  %v346 = vmul.f32 %v341, %v345
  %vm347 = vweird.f32 %v217
  %vm348 = vweird.f32 %v341
  %vm349 = vmor %vm347, %vm348
  %v350 = vsel %vm349, %v341, %v346
  %v351 = vrsqrt.pop %v218
  %v352 = vmul.f32 %v351, %v218
  %v353 = vmul.f32 %v352, %v351
  %v354 = vmul.f32 0.5, %v353
  %v355 = vsub.f32 1.5, %v354
  %v356 = vmul.f32 %v351, %v355
  %vm357 = vweird.f32 %v218
  %vm358 = vweird.f32 %v351
  %vm359 = vmor %vm357, %vm358
  %v360 = vsel %vm359, %v351, %v356
  %v361 = vrsqrt.pop %v219
  %v362 = vmul.f32 %v361, %v219
  %v363 = vmul.f32 %v362, %v361
  %v364 = vmul.f32 0.5, %v363
  %v365 = vsub.f32 1.5, %v364
  %v366 = vmul.f32 %v361, %v365
  %vm367 = vweird.f32 %v219
  %vm368 = vweird.f32 %v361
  %vm369 = vmor %vm367, %vm368
  %v370 = vsel %vm369, %v361, %v366
  %v371 = vrsqrt.pop %v220
  %v372 = vmul.f32 %v371, %v220
  %v373 = vmul.f32 %v372, %v371
  %v374 = vmul.f32 0.5, %v373
  %v375 = vsub.f32 1.5, %v374
  %v376 = vmul.f32 %v371, %v375
  %vm377 = vweird.f32 %v220
  %vm378 = vweird.f32 %v371
  %vm379 = vmor %vm377, %vm378
  %v380 = vsel %vm379, %v371, %v376
  %v381 = vmul.f32 %v109, %v230
  %v382 = vmul.f32 %v110, %v240
  %v383 = vmul.f32 %v111, %v250
  %v384 = vmul.f32 %v112, %v260
  %v385 = vmul.f32 %v113, %v270
  %v386 = vmul.f32 %v114, %v280
  %v387 = vmul.f32 %v115, %v290
  %v388 = vmul.f32 %v116, %v300
  %v389 = vmul.f32 %v117, %v310
  %v390 = vmul.f32 %v118, %v320
  %v391 = vmul.f32 %v119, %v330
  %v392 = vmul.f32 %v120, %v340
  %v393 = vmul.f32 %v121, %v350
  %v394 = vmul.f32 %v122, %v360
  %v395 = vmul.f32 %v123, %v370
  %v396 = vmul.f32 %v124, %v380
  %v397 = vld [vmem:[%s1] sm:$0x1]
  %v399 = vperm.slane %v397, 0
  %v401 = vmul.f32 %v381, %v399
  %v402 = vmul.f32 %v382, %v399
  %v403 = vmul.f32 %v383, %v399
  %v404 = vmul.f32 %v384, %v399
  %v405 = vmul.f32 %v385, %v399
  %v406 = vmul.f32 %v386, %v399
  %v407 = vmul.f32 %v387, %v399
  %v408 = vmul.f32 %v388, %v399
  %v409 = vmul.f32 %v389, %v399
  %v410 = vmul.f32 %v390, %v399
  %v411 = vmul.f32 %v391, %v399
  %v412 = vmul.f32 %v392, %v399
  %v413 = vmul.f32 %v393, %v399
  %v414 = vmul.f32 %v394, %v399
  %v415 = vmul.f32 %v395, %v399
  %v416 = vmul.f32 %v396, %v399
  %v417 = vld [vmem:[%s2] sm:$0x1]
  %v419 = vperm.slane %v417, 0
  %v421 = vadd.f32 %v401, %v419
  %v422 = vadd.f32 %v402, %v419
  %v423 = vadd.f32 %v403, %v419
  %v424 = vadd.f32 %v404, %v419
  %v425 = vadd.f32 %v405, %v419
  %v426 = vadd.f32 %v406, %v419
  %v427 = vadd.f32 %v407, %v419
  %v428 = vadd.f32 %v408, %v419
  %v429 = vadd.f32 %v409, %v419
  %v430 = vadd.f32 %v410, %v419
  %v431 = vadd.f32 %v411, %v419
  %v432 = vadd.f32 %v412, %v419
  %v433 = vadd.f32 %v413, %v419
  %v434 = vadd.f32 %v414, %v419
  %v435 = vadd.f32 %v415, %v419
  %v436 = vadd.f32 %v416, %v419
  %v437 = vpack.c.bf16 %v422, %v421
  %v438 = vpack.c.bf16 %v424, %v423
  %v439 = vpack.c.bf16 %v426, %v425
  %v440 = vpack.c.bf16 %v428, %v427
  %v441 = vpack.c.bf16 %v430, %v429
  %v442 = vpack.c.bf16 %v432, %v431
  %v443 = vpack.c.bf16 %v434, %v433
  %v444 = vpack.c.bf16 %v436, %v435
  %v445 = vld [vmem:[%s3] sm:$0xf]
  %v446 = vld [vmem:[%s3 + $0x4] sm:$0xf]
  %v447 = vld [vmem:[%s3 + $0x8] sm:$0xf]
  %v448 = vld [vmem:[%s3 + $0xc] sm:$0xf]
  %v449 = vld [vmem:[%s4] sm:$0x1]
  %v451 = vperm.slane %v449, 0
  %v457 = vunpack.c.l.b16 %v445
  %v458 = vunpack.c.l.b16 %v446
  %v459 = vunpack.c.l.b16 %v447
  %v460 = vunpack.c.l.b16 %v448
  %v461 = vpack.c.b16 %v458, %v457
  %v462 = vpack.c.b16 %v460, %v459
  %v466 = vsel %vm37, %v437, 0
  %v469 = vsel %vm37, %v438, 0
  %v472 = vsel %vm37, %v439, 0
  %v475 = vsel %vm37, %v440, 0
  %v478 = vsel %vm37, %v441, 0
  %v481 = vsel %vm37, %v442, 0
  %v484 = vsel %vm37, %v443, 0
  %v487 = vsel %vm37, %v444, 0
  %489 = vmatpush.bf16.msra.mxu0 0
  %490 = vmatpush.bf16.msra.mxu0 0
  %491 = vmatpush.bf16.msra.mxu0 0
  %492 = vmatpush.bf16.msra.mxu0 0
  %493 = vmatpush.bf16.msra.mxu0 0
  %494 = vmatpush.bf16.msra.mxu0 0
  %495 = vmatpush.bf16.msra.mxu0 %v462
  %496 = vmatpush.bf16.msra.mxu0 %v461
  %497 = vmatmul.bf16.gmra.mxu0 %v466
  %v498 = vpop.f32.mrf.mxu0
  %v499 = vadd.f32 %v451, %v498
  %v500 = vpop.f32.mrf.mxu0
  %v501 = vadd.f32 %v451, %v500
  %502 = vmatmul.bf16.gmra.mxu0 %v469
  %v503 = vpop.f32.mrf.mxu0
  %v504 = vadd.f32 %v451, %v503
  %v505 = vpop.f32.mrf.mxu0
  %v506 = vadd.f32 %v451, %v505
  %507 = vmatmul.bf16.gmra.mxu0 %v472
  %v508 = vpop.f32.mrf.mxu0
  %v509 = vadd.f32 %v451, %v508
  %v510 = vpop.f32.mrf.mxu0
  %v511 = vadd.f32 %v451, %v510
  %512 = vmatmul.bf16.gmra.mxu0 %v475
  %v513 = vpop.f32.mrf.mxu0
  %v514 = vadd.f32 %v451, %v513
  %v515 = vpop.f32.mrf.mxu0
  %v516 = vadd.f32 %v451, %v515
  %517 = vmatmul.bf16.gmra.mxu0 %v478
  %v518 = vpop.f32.mrf.mxu0
  %v519 = vadd.f32 %v451, %v518
  %v520 = vpop.f32.mrf.mxu0
  %v521 = vadd.f32 %v451, %v520
  %522 = vmatmul.bf16.gmra.mxu0 %v481
  %v523 = vpop.f32.mrf.mxu0
  %v524 = vadd.f32 %v451, %v523
  %v525 = vpop.f32.mrf.mxu0
  %v526 = vadd.f32 %v451, %v525
  %527 = vmatmul.bf16.gmra.mxu0 %v484
  %v528 = vpop.f32.mrf.mxu0
  %v529 = vadd.f32 %v451, %v528
  %v530 = vpop.f32.mrf.mxu0
  %v531 = vadd.f32 %v451, %v530
  %532 = vmatmul.bf16.gmra.mxu0 %v487
  %v533 = vpop.f32.mrf.mxu0
  %v534 = vadd.f32 %v451, %v533
  %v535 = vpop.f32.mrf.mxu0
  %v536 = vadd.f32 %v451, %v535
  %537 = vdwg.mxu0
  %v538 = vmul.f32 %v499, 0.35355338
  %v539 = vmul.f32 %v501, 0.35355338
  %v540 = vmul.f32 %v504, 0.35355338
  %v541 = vmul.f32 %v506, 0.35355338
  %v542 = vmul.f32 %v509, 0.35355338
  %v543 = vmul.f32 %v511, 0.35355338
  %v544 = vmul.f32 %v514, 0.35355338
  %v545 = vmul.f32 %v516, 0.35355338
  %v546 = vmul.f32 %v519, 0.35355338
  %v547 = vmul.f32 %v521, 0.35355338
  %v548 = vmul.f32 %v524, 0.35355338
  %v549 = vmul.f32 %v526, 0.35355338
  %v550 = vmul.f32 %v529, 0.35355338
  %v551 = vmul.f32 %v531, 0.35355338
  %v552 = vmul.f32 %v534, 0.35355338
  %v553 = vmul.f32 %v536, 0.35355338
  %v554 = vpack.c.bf16 %v538, %v538
  %v555 = vpack.c.bf16 %v539, %v539
  %v556 = vpack.c.bf16 %v540, %v540
  %v557 = vpack.c.bf16 %v541, %v541
  %v558 = vpack.c.bf16 %v542, %v542
  %v559 = vpack.c.bf16 %v543, %v543
  %v560 = vpack.c.bf16 %v544, %v544
  %v561 = vpack.c.bf16 %v545, %v545
  %v562 = vpack.c.bf16 %v546, %v546
  %v563 = vpack.c.bf16 %v547, %v547
  %v564 = vpack.c.bf16 %v548, %v548
  %v565 = vpack.c.bf16 %v549, %v549
  %v566 = vpack.c.bf16 %v550, %v550
  %v567 = vpack.c.bf16 %v551, %v551
  %v568 = vpack.c.bf16 %v552, %v552
  %v569 = vpack.c.bf16 %v553, %v553
  %vm570 = vcmask 257024
  %571 = vst.msk [vmem:[%s5] sm:$0xf] %vm570, %v554
  %572 = vst.msk [vmem:[%s5 + $0x4] sm:$0xf] %vm570, %v555
  %573 = vst.msk [vmem:[%s5 + $0x8] sm:$0xf] %vm570, %v556
  %574 = vst.msk [vmem:[%s5 + $0xc] sm:$0xf] %vm570, %v557
  %575 = vst.msk [vmem:[%s5 + $0x10] sm:$0xf] %vm570, %v558
  %576 = vst.msk [vmem:[%s5 + $0x14] sm:$0xf] %vm570, %v559
  %577 = vst.msk [vmem:[%s5 + $0x18] sm:$0xf] %vm570, %v560
  %578 = vst.msk [vmem:[%s5 + $0x1c] sm:$0xf] %vm570, %v561
  %579 = vst.msk [vmem:[%s5 + $0x20] sm:$0xf] %vm570, %v562
  %580 = vst.msk [vmem:[%s5 + $0x24] sm:$0xf] %vm570, %v563
  %581 = vst.msk [vmem:[%s5 + $0x28] sm:$0xf] %vm570, %v564
  %582 = vst.msk [vmem:[%s5 + $0x2c] sm:$0xf] %vm570, %v565
  %583 = vst.msk [vmem:[%s5 + $0x30] sm:$0xf] %vm570, %v566
  %584 = vst.msk [vmem:[%s5 + $0x34] sm:$0xf] %vm570, %v567
  %585 = vst.msk [vmem:[%s5 + $0x38] sm:$0xf] %vm570, %v568
  %586 = vst.msk [vmem:[%s5 + $0x3c] sm:$0xf] %vm570, %v569
  %v587 = vpack.c.bf16 %v499, %v499
  %v588 = vpack.c.bf16 %v501, %v501
  %v589 = vpack.c.bf16 %v504, %v504
  %v590 = vpack.c.bf16 %v506, %v506
  %v591 = vpack.c.bf16 %v509, %v509
  %v592 = vpack.c.bf16 %v511, %v511
  %v593 = vpack.c.bf16 %v514, %v514
  %v594 = vpack.c.bf16 %v516, %v516
  %v595 = vpack.c.bf16 %v519, %v519
  %v596 = vpack.c.bf16 %v521, %v521
  %v597 = vpack.c.bf16 %v524, %v524
  %v598 = vpack.c.bf16 %v526, %v526
  %v599 = vpack.c.bf16 %v529, %v529
  %v600 = vpack.c.bf16 %v531, %v531
  %v601 = vpack.c.bf16 %v534, %v534
  %v602 = vpack.c.bf16 %v536, %v536
  %619 = vrot.lane.b32.xlu0 %v587, 96
  %v620 = vpop.permute.xlu0 %619
  %621 = vrot.lane.b32.xlu0 %v588, 96
  %v622 = vpop.permute.xlu0 %621
  %623 = vrot.lane.b32.xlu0 %v589, 96
  %v624 = vpop.permute.xlu0 %623
  %625 = vrot.lane.b32.xlu0 %v590, 96
  %v626 = vpop.permute.xlu0 %625
  %627 = vrot.lane.b32.xlu0 %v591, 96
  %v628 = vpop.permute.xlu0 %627
  %629 = vrot.lane.b32.xlu0 %v592, 96
  %v630 = vpop.permute.xlu0 %629
  %631 = vrot.lane.b32.xlu0 %v593, 96
  %v632 = vpop.permute.xlu0 %631
  %633 = vrot.lane.b32.xlu0 %v594, 96
  %v634 = vpop.permute.xlu0 %633
  %635 = vrot.lane.b32.xlu0 %v595, 96
  %v636 = vpop.permute.xlu0 %635
  %637 = vrot.lane.b32.xlu0 %v596, 96
  %v638 = vpop.permute.xlu0 %637
  %639 = vrot.lane.b32.xlu0 %v597, 96
  %v640 = vpop.permute.xlu0 %639
  %641 = vrot.lane.b32.xlu0 %v598, 96
  %v642 = vpop.permute.xlu0 %641
  %643 = vrot.lane.b32.xlu0 %v599, 96
  %v644 = vpop.permute.xlu0 %643
  %645 = vrot.lane.b32.xlu0 %v600, 96
  %v646 = vpop.permute.xlu0 %645
  %647 = vrot.lane.b32.xlu0 %v601, 96
  %v648 = vpop.permute.xlu0 %647
  %649 = vrot.lane.b32.xlu0 %v602, 96
  %v650 = vpop.permute.xlu0 %649
  %s667 = scalar_lea.vmem %s5, 64
  %668 = vst.msk [vmem:[%s667] sm:$0xf] %vm570, %v620
  %669 = vst.msk [vmem:[%s667 + $0x4] sm:$0xf] %vm570, %v622
  %670 = vst.msk [vmem:[%s667 + $0x8] sm:$0xf] %vm570, %v624
  %671 = vst.msk [vmem:[%s667 + $0xc] sm:$0xf] %vm570, %v626
  %672 = vst.msk [vmem:[%s667 + $0x10] sm:$0xf] %vm570, %v628
  %673 = vst.msk [vmem:[%s667 + $0x14] sm:$0xf] %vm570, %v630
  %674 = vst.msk [vmem:[%s667 + $0x18] sm:$0xf] %vm570, %v632
  %675 = vst.msk [vmem:[%s667 + $0x1c] sm:$0xf] %vm570, %v634
  %676 = vst.msk [vmem:[%s667 + $0x20] sm:$0xf] %vm570, %v636
  %677 = vst.msk [vmem:[%s667 + $0x24] sm:$0xf] %vm570, %v638
  %678 = vst.msk [vmem:[%s667 + $0x28] sm:$0xf] %vm570, %v640
  %679 = vst.msk [vmem:[%s667 + $0x2c] sm:$0xf] %vm570, %v642
  %680 = vst.msk [vmem:[%s667 + $0x30] sm:$0xf] %vm570, %v644
  %681 = vst.msk [vmem:[%s667 + $0x34] sm:$0xf] %vm570, %v646
  %682 = vst.msk [vmem:[%s667 + $0x38] sm:$0xf] %vm570, %v648
  %683 = vst.msk [vmem:[%s667 + $0x3c] sm:$0xf] %vm570, %v650
  %684 = vrot.lane.b32.xlu0 %v587, 64
  %v685 = vpop.permute.xlu0 %684
  %686 = vrot.lane.b32.xlu0 %v588, 64
  %v687 = vpop.permute.xlu0 %686
  %688 = vrot.lane.b32.xlu0 %v589, 64
  %v689 = vpop.permute.xlu0 %688
  %690 = vrot.lane.b32.xlu0 %v590, 64
  %v691 = vpop.permute.xlu0 %690
  %692 = vrot.lane.b32.xlu0 %v591, 64
  %v693 = vpop.permute.xlu0 %692
  %694 = vrot.lane.b32.xlu0 %v592, 64
  %v695 = vpop.permute.xlu0 %694
  %696 = vrot.lane.b32.xlu0 %v593, 64
  %v697 = vpop.permute.xlu0 %696
  %698 = vrot.lane.b32.xlu0 %v594, 64
  %v699 = vpop.permute.xlu0 %698
  %700 = vrot.lane.b32.xlu0 %v595, 64
  %v701 = vpop.permute.xlu0 %700
  %702 = vrot.lane.b32.xlu0 %v596, 64
  %v703 = vpop.permute.xlu0 %702
  %704 = vrot.lane.b32.xlu0 %v597, 64
  %v705 = vpop.permute.xlu0 %704
  %706 = vrot.lane.b32.xlu0 %v598, 64
  %v707 = vpop.permute.xlu0 %706
  %708 = vrot.lane.b32.xlu0 %v599, 64
  %v709 = vpop.permute.xlu0 %708
  %710 = vrot.lane.b32.xlu0 %v600, 64
  %v711 = vpop.permute.xlu0 %710
  %712 = vrot.lane.b32.xlu0 %v601, 64
  %v713 = vpop.permute.xlu0 %712
  %714 = vrot.lane.b32.xlu0 %v602, 64
  %v715 = vpop.permute.xlu0 %714
  %s732 = scalar_lea.vmem %s5, 128
  %733 = vst.msk [vmem:[%s732] sm:$0xf] %vm570, %v685
  %734 = vst.msk [vmem:[%s732 + $0x4] sm:$0xf] %vm570, %v687
  %735 = vst.msk [vmem:[%s732 + $0x8] sm:$0xf] %vm570, %v689
  %736 = vst.msk [vmem:[%s732 + $0xc] sm:$0xf] %vm570, %v691
  %737 = vst.msk [vmem:[%s732 + $0x10] sm:$0xf] %vm570, %v693
  %738 = vst.msk [vmem:[%s732 + $0x14] sm:$0xf] %vm570, %v695
  %739 = vst.msk [vmem:[%s732 + $0x18] sm:$0xf] %vm570, %v697
  %740 = vst.msk [vmem:[%s732 + $0x1c] sm:$0xf] %vm570, %v699
  %741 = vst.msk [vmem:[%s732 + $0x20] sm:$0xf] %vm570, %v701
  %742 = vst.msk [vmem:[%s732 + $0x24] sm:$0xf] %vm570, %v703
  %743 = vst.msk [vmem:[%s732 + $0x28] sm:$0xf] %vm570, %v705
  %744 = vst.msk [vmem:[%s732 + $0x2c] sm:$0xf] %vm570, %v707
  %745 = vst.msk [vmem:[%s732 + $0x30] sm:$0xf] %vm570, %v709
  %746 = vst.msk [vmem:[%s732 + $0x34] sm:$0xf] %vm570, %v711
  %747 = vst.msk [vmem:[%s732 + $0x38] sm:$0xf] %vm570, %v713
  %748 = vst.msk [vmem:[%s732 + $0x3c] sm:$0xf] %vm570, %v715
  // Predicated region
  $region22: #{tpu_custom_call.1} parent=0 // pred_check
    _
  $region23: #{tpu_custom_call.1} parent=0 // pred_check_branch
    %750 = sbr.rel (0) target = $region25
  $region24: #{tpu_custom_call.1} parent=0 // pred_region
    _
  $region25: #{tpu_custom_call.1} parent=0 // pred_fallthru
    _
  // Predicated region
  $region26: #{tpu_custom_call.1} parent=0 // pred_check
    _
  $region27: #{tpu_custom_call.1} parent=0 // pred_check_branch
    %752 = sbr.rel (0) target = $region29
  $region28: #{tpu_custom_call.1} parent=0 // pred_region
    _
  $region29: #{tpu_custom_call.1} parent=0 // pred_fallthru
    _

</llo_original>
